<compile_context>
chip_gen: v6e
topology: v6e:2x2x1
jax: 0.10.0
libtpu: 0.0.40
codegen_flags: <defaults>
</compile_context>

<pallas_src>
import functools

import jax
import jax.numpy as jnp
from jax.experimental import pallas as pl
from jax.experimental.pallas import tpu as pltpu


def _classifier_kernel(f_ref, wt_ref, b_ref, out_ref, *, inv_hw):
    # f_ref : [bN, HW, C]  feature tile, channels on the lane axis (native dtype)
    # wt_ref: [C, Kp]      1x1-conv weight transposed, lane-padded (resident across grid)
    # b_ref : [1, Kp]      conv bias, lane-padded (resident across grid)
    # out_ref:[bN, Kp]     logits tile
    f = f_ref[...]
    # AdaptiveAvgPool2d(1): spatial sum over the HW (sublane) axis, accumulated in f32.
    pooled = jnp.sum(f.astype(jnp.float32), axis=1)                     # [bN, C]
    # 1x1 conv == channel matmul on the MXU (2048-wide, lane-aligned contraction).
    logits = jnp.dot(pooled, wt_ref[...], preferred_element_type=jnp.float32)  # [bN, Kp]
    # Apply 1/HW on the tiny [bN, Kp] tile (linear, so equivalent to pooling with mean),
    # then add bias via implicit broadcast.
    out_ref[...] = logits * inv_hw + b_ref[...]


def _pick_bn(n, hw, c, itemsize, target_bytes):
    """Largest batch tile whose single feature buffer stays under target_bytes."""
    hw_pad = -(-hw // 8) * 8
    row_bytes = hw_pad * c * itemsize
    bn = max(1, target_bytes // row_bytes)
    if bn >= n:
        return n                        # whole batch in one block (block dim == full dim)
    return max(8, (bn // 8) * 8)        # multiple of 8 when tiling (output block constraint)


def resnet_fc_cam_forward(features_nchw, conv_w, conv_b):
    """features_nchw: [N, 2048, H, W] (native dtype), conv_w: [K, 2048, 1, 1], conv_b: [K].

    Returns (logits [N, K, 1, 1], stashed_features) matching Resnet_fc_CAM.forward."""
    N, C, H, W = features_nchw.shape
    K = conv_w.shape[0]
    HW = H * W

    # Channels-last layout for the kernel. On a real JAX/TPU backbone the features arrive
    # NHWC-native so this transpose is free at the producer; here it is a wrapper-side op.
    f = jnp.transpose(features_nchw, (0, 2, 3, 1)).reshape(N, HW, C)

    # Lane-dense classifier params: pad K up to a multiple of 128.
    Kp = -(-K // 128) * 128
    wt = conv_w.reshape(K, C).T.astype(jnp.float32)                     # [C, K]
    wt = jnp.pad(wt, ((0, 0), (0, Kp - K)))                             # [C, Kp]
    b = jnp.pad(conv_b.astype(jnp.float32).reshape(1, K),
                ((0, 0), (0, Kp - K)))                                  # [1, Kp]

    # Generation-aware batch tile: keep a single double-buffered feature tile well inside
    # scoped VMEM (smaller on v7x's 64 MiB VMEM, larger on v5e/v6e's 128 MiB).
    try:
        vmem_cap = pltpu.get_tpu_info().vmem_capacity_bytes
    except Exception:  # pragma: no cover - fall back to the conservative budget
        vmem_cap = 64 << 20
    target_buf_bytes = (24 << 20) if vmem_cap >= (96 << 20) else (12 << 20)
    itemsize = jnp.dtype(f.dtype).itemsize
    bN = _pick_bn(N, HW, C, itemsize, target_buf_bytes)

    # Explicit VMEM budget: double-buffered feature tiles + resident weight/bias + output.
    hw_pad = -(-HW // 8) * 8
    bn_pad = -(-bN // 8) * 8
    vmem_limit = (2 * bN * hw_pad * C * itemsize        # feature tiles (double-buffered)
                  + 2 * C * Kp * 4                      # weight (conservatively x2)
                  + 2 * 8 * Kp * 4                      # bias
                  + 2 * bn_pad * Kp * 4                 # output tiles
                  + (8 << 20))                          # headroom
    vmem_limit = int(min(vmem_limit, min(vmem_cap, 100 << 20)))

    kernel = functools.partial(_classifier_kernel, inv_hw=float(1.0 / HW))

    out = pl.pallas_call(
        kernel,
        out_shape=jax.ShapeDtypeStruct((N, Kp), jnp.float32),
        grid=(pl.cdiv(N, bN),),
        in_specs=[
            pl.BlockSpec((bN, HW, C), lambda i: (i, 0, 0)),   # streamed feature tiles
            pl.BlockSpec((C, Kp), lambda i: (0, 0)),          # resident weight
            pl.BlockSpec((1, Kp), lambda i: (0, 0)),          # resident bias
        ],
        out_specs=pl.BlockSpec((bN, Kp), lambda i: (i, 0)),
        compiler_params=pltpu.CompilerParams(
            dimension_semantics=("parallel",),                # shards N-tiles across TCs
            vmem_limit_bytes=vmem_limit,
        ),
    )(f, wt, b)

    logits = out[:, :K].reshape(N, K, 1, 1)                   # matches PyTorch x shape
    # Mirrors `self.features = features.cpu()` — host offload happens outside the kernel.
    try:
        stashed_features = jax.device_put(features_nchw, jax.devices("cpu")[0])
    except Exception:  # pragma: no cover - keep on device if no CPU backend is exposed
        stashed_features = features_nchw
    return logits, stashed_features


if __name__ == "__main__":
    # Small, deterministic example consistent with the module:
    # the classifier_layer is hard-wired to 2048 input channels.
    N, C, H, W = 2, 2048, 4, 4
    nb_classes = 10

    key = jax.random.PRNGKey(0)
    kf, kw, kb = jax.random.split(key, 3)
    features = jax.random.normal(kf, (N, C, H, W), jnp.float32)
    conv_w = jax.random.normal(kw, (nb_classes, C, 1, 1), jnp.float32) * 0.02
    conv_b = jax.random.normal(kb, (nb_classes,), jnp.float32) * 0.02

    logits, stashed = resnet_fc_cam_forward(features, conv_w, conv_b)
    logits = jax.block_until_ready(logits)

    # Pure-JAX reference: 1x1 conv over channels followed by global average pool.
    conv_out = jnp.einsum("nchw,kc->nkhw", features, conv_w.reshape(nb_classes, C)) \
        + conv_b.reshape(1, nb_classes, 1, 1)
    ref = jnp.mean(conv_out, axis=(2, 3)).reshape(N, nb_classes, 1, 1)

    assert logits.shape == (N, nb_classes, 1, 1)
    assert stashed.shape == (N, C, H, W)
    assert jnp.allclose(logits, ref, atol=1e-4, rtol=1e-4)
    print("KERNEL_OK")
</pallas_src>

<mosaic_0001>
module attributes {stable_mosaic.version = 11 : i64} {
  func.func @_classifier_kernel(%arg0: i32, %arg1: memref<2x16x2048xf32, #tpu.memory_space<vmem>>, %arg2: memref<2048x128xf32, #tpu.memory_space<vmem>>, %arg3: memref<1x128xf32, #tpu.memory_space<vmem>>, %arg4: memref<2x128xf32, #tpu.memory_space<vmem>>) attributes {dimension_semantics = [#tpu.dimension_semantics<parallel>], iteration_bounds = array<i64: 1>, scalar_prefetch = 0 : i64, scratch_operands = 0 : i64, tpu.core_type = #tpu.core_type<tc>, window_params = [{transform_indices = @transform_0, window_bounds = array<i64: 2, 16, 2048>}, {pipeline_mode = #tpu.pipeline_mode<synchronous>, transform_indices = @transform_1, window_bounds = array<i64: 2048, 128>}, {pipeline_mode = #tpu.pipeline_mode<synchronous>, transform_indices = @transform_2, window_bounds = array<i64: 1, 128>}, {transform_indices = @transform_3, window_bounds = array<i64: 2, 128>}]} {
    %c0 = arith.constant 0 : index
    %c0_0 = arith.constant 0 : index
    %c0_1 = arith.constant 0 : index
    %0 = vector.load %arg1[%c0, %c0_0, %c0_1] : memref<2x16x2048xf32, #tpu.memory_space<vmem>>, vector<2x16x2048xf32>
    %cst = arith.constant dense<0.000000e+00> : vector<2x2048xf32>
    %1 = vector.multi_reduction <add>, %0, %cst [1] : vector<2x16x2048xf32> to vector<2x2048xf32>
    %c0_2 = arith.constant 0 : index
    %c0_3 = arith.constant 0 : index
    %2 = vector.load %arg2[%c0_2, %c0_3] : memref<2048x128xf32, #tpu.memory_space<vmem>>, vector<2048x128xf32>
    %cst_4 = arith.constant dense<0.000000e+00> : vector<2x128xf32>
    %3 = tpu.matmul %1, %2, %cst_4 {dimension_numbers = #tpu.dot_dimension_numbers<[1], [0], [0], [1], [0, 0, 1, 1], [], []>} : vector<2x2048xf32>, vector<2048x128xf32>, vector<2x128xf32> -> vector<2x128xf32>
    %cst_5 = arith.constant 6.250000e-02 : f32
    %4 = vector.broadcast %cst_5 : f32 to vector<2x128xf32>
    %5 = arith.mulf %3, %4 : vector<2x128xf32>
    %c0_6 = arith.constant 0 : index
    %c0_7 = arith.constant 0 : index
    %6 = vector.load %arg3[%c0_6, %c0_7] : memref<1x128xf32, #tpu.memory_space<vmem>>, vector<1x128xf32>
    %7 = vector.broadcast %6 : vector<1x128xf32> to vector<2x128xf32>
    %8 = arith.addf %5, %7 : vector<2x128xf32>
    %c0_8 = arith.constant 0 : index
    %c0_9 = arith.constant 0 : index
    %9 = vector.load %arg4[%c0_8, %c0_9] : memref<2x128xf32, #tpu.memory_space<vmem>>, vector<2x128xf32>
    tpu.vector_store %arg4[%c0_8, %c0_9], %8 {strides = array<i32>} : memref<2x128xf32, #tpu.memory_space<vmem>>, vector<2x128xf32>,
    return
  }
  func.func @transform_0(%arg0: i32) -> (i32, i32, i32) {
    %c0_i32 = arith.constant 0 : i32
    %c0_i32_0 = arith.constant 0 : i32
    %c0_i32_1 = arith.constant 0 : i32
    return %arg0, %c0_i32, %c0_i32_0 : i32, i32, i32
  }
  func.func @transform_1(%arg0: i32) -> (i32, i32) {
    %c0_i32 = arith.constant 0 : i32
    %c0_i32_0 = arith.constant 0 : i32
    %c0_i32_1 = arith.constant 0 : i32
    return %c0_i32, %c0_i32_0 : i32, i32
  }
  func.func @transform_2(%arg0: i32) -> (i32, i32) {
    %c0_i32 = arith.constant 0 : i32
    %c0_i32_0 = arith.constant 0 : i32
    %c0_i32_1 = arith.constant 0 : i32
    return %c0_i32, %c0_i32_0 : i32, i32
  }
  func.func @transform_3(%arg0: i32) -> (i32, i32) {
    %c0_i32 = arith.constant 0 : i32
    %c0_i32_0 = arith.constant 0 : i32
    return %arg0, %c0_i32 : i32, i32
  }
}

</mosaic_0001>

<llo_original>
// kernel: tpu_custom_call.1
$region0: #{tpu_custom_call.1}
  #allocation0 [shape = 'u32[]', space=smem, size = 0x4, offset = 0x4, fixed_abs, tag = 'smem constant byte address 0x4 - core index']
  #allocation1 [shape = 'u32[144,128]{1,0:T(1,128)}', space=vmem, size = 0x12000, scoped, tag = 'internal scratch']
  %s0 = inlined_call_operand.hbm [shape: f32[2,16,2048], index: 0, kind: input, shape index: {}]
  %s1 = inlined_call_operand.hbm [shape: f32[2048,128], index: 1, kind: input, shape index: {}]
  %s2 = inlined_call_operand.vmem [shape: f32[1,128], index: 2, kind: input, shape index: {}]
  %s3 = inlined_call_operand.hbm [shape: f32[2,128], index: 3, kind: output, shape index: {}]
  %s4 = sld [smem:[#allocation0]]
  $region30: #{tpu_custom_call.1} parent=0
    _
  %s6 = ssub.s32 1, %s4
  %s7 = scalar_select 0, %s6, %s4
  $region1: #{tpu_custom_call.1} parent=0
    #allocation2 [shape = 'u8[262144]{0}', space=vmem, size = 0x40000, scoped, tag = 'input window, operand 0, single buffered']
    #allocation3 [shape = 's32[1]{0}', space=sflag, size = 0x4, scoped, tag = 'scoped memory for tpu_custom_call.1']
    #allocation4 [shape = 's32[1]{0}', space=sflag, size = 0x4, scoped, tag = 'scoped memory for tpu_custom_call.1']
    #allocation5 [shape = 'u8[1048576]{0}', space=vmem, size = 0x100000, scoped, tag = 'input window, operand 1, single buffered']
    #allocation6 [shape = 's32[1]{0}', space=sflag, size = 0x4, scoped, tag = 'scoped memory for tpu_custom_call.1']
    #allocation7 [shape = 'u8[1024]{0}', space=vmem, size = 0x400, scoped, tag = 'output window, operand 0, single buffered']
    %8 = vsyncpa [#allocation3], 0
    %9 = vsyncpa [#allocation6], 0
    %10 = vsyncpa [#allocation4], 0
    // Predicated region
    $region2: #{tpu_custom_call.1} parent=1 // pred_check
      _
    $region3: #{tpu_custom_call.1} parent=1 // pred_check_branch
      %12 = sbr.rel (0) target = $region5
    $region4: #{tpu_custom_call.1} parent=1 // pred_region
      %s14 = ssub.s32 8192, 8192
      %15 = vsyncadd [#allocation3], %s14
      %s16 = sshll.u32 [#allocation2], 4
      %s17 = int_to_ptr.vmem [resolvable:$true] %s16
      %22 = dma.hbm_to_vmem [thread:$0]  %s0, 8192, %s17, [#allocation3], 2048, 2048, 128
    $region5: #{tpu_custom_call.1} parent=1 // pred_fallthru
      _
    // Predicated region
    $region6: #{tpu_custom_call.1} parent=1 // pred_check
      _
    $region7: #{tpu_custom_call.1} parent=1 // pred_check_branch
      %24 = sbr.rel (0) target = $region9
    $region8: #{tpu_custom_call.1} parent=1 // pred_region
      %s26 = ssub.s32 32768, 32768
      %27 = vsyncadd [#allocation6], %s26
      %s28 = sshll.u32 [#allocation5], 4
      %s29 = int_to_ptr.vmem [resolvable:$true] %s28
      %34 = dma.hbm_to_vmem [thread:$0]  %s1, 32768, %s29, [#allocation6], 128, 128, 8
    $region9: #{tpu_custom_call.1} parent=1 // pred_fallthru
      _
    // Predicated region
    $region10: #{tpu_custom_call.1} parent=1 // pred_check
      _
    $region11: #{tpu_custom_call.1} parent=1 // pred_check_branch
      %36 = sbr.rel (0) target = $region13
    $region12: #{tpu_custom_call.1} parent=1 // pred_region
      _
    $region13: #{tpu_custom_call.1} parent=1 // pred_fallthru
      _
    // Predicated region
    $region14: #{tpu_custom_call.1} parent=1 // pred_check
      _
    $region15: #{tpu_custom_call.1} parent=1 // pred_check_branch
      %38 = sbr.rel (0) target = $region17
    $region16: #{tpu_custom_call.1} parent=1 // pred_region
      %39 = dma.done [#allocation3], 8192
    $region17: #{tpu_custom_call.1} parent=1 // pred_fallthru
      _
    // Predicated region
    $region18: #{tpu_custom_call.1} parent=1 // pred_check
      _
    $region19: #{tpu_custom_call.1} parent=1 // pred_check_branch
      %41 = sbr.rel (0) target = $region21
    $region20: #{tpu_custom_call.1} parent=1 // pred_region
      %42 = dma.done [#allocation6], 32768
    $region21: #{tpu_custom_call.1} parent=1 // pred_fallthru
      _
    %v43 = vld [vmem:[#allocation2] sm:$0xff]
    %v44 = vld [vmem:[#allocation2 + $0x8] sm:$0xff]
    %v45 = vld [vmem:[#allocation2 + $0x10] sm:$0xff]
    %v46 = vld [vmem:[#allocation2 + $0x18] sm:$0xff]
    %v47 = vld [vmem:[#allocation2 + $0x20] sm:$0xff]
    %v48 = vld [vmem:[#allocation2 + $0x28] sm:$0xff]
    %v49 = vld [vmem:[#allocation2 + $0x30] sm:$0xff]
    %v50 = vld [vmem:[#allocation2 + $0x38] sm:$0xff]
    %v51 = vld [vmem:[#allocation2 + $0x40] sm:$0xff]
    %v52 = vld [vmem:[#allocation2 + $0x48] sm:$0xff]
    %v53 = vld [vmem:[#allocation2 + $0x50] sm:$0xff]
    %v54 = vld [vmem:[#allocation2 + $0x58] sm:$0xff]
    %v55 = vld [vmem:[#allocation2 + $0x60] sm:$0xff]
    %v56 = vld [vmem:[#allocation2 + $0x68] sm:$0xff]
    %v57 = vld [vmem:[#allocation2 + $0x70] sm:$0xff]
    %v58 = vld [vmem:[#allocation2 + $0x78] sm:$0xff]
    %v59 = vld [vmem:[#allocation2 + $0x80] sm:$0xff]
    %v60 = vld [vmem:[#allocation2 + $0x88] sm:$0xff]
    %v61 = vld [vmem:[#allocation2 + $0x90] sm:$0xff]
    %v62 = vld [vmem:[#allocation2 + $0x98] sm:$0xff]
    %v63 = vld [vmem:[#allocation2 + $0xa0] sm:$0xff]
    %v64 = vld [vmem:[#allocation2 + $0xa8] sm:$0xff]
    %v65 = vld [vmem:[#allocation2 + $0xb0] sm:$0xff]
    %v66 = vld [vmem:[#allocation2 + $0xb8] sm:$0xff]
    %v67 = vld [vmem:[#allocation2 + $0xc0] sm:$0xff]
    %v68 = vld [vmem:[#allocation2 + $0xc8] sm:$0xff]
    %v69 = vld [vmem:[#allocation2 + $0xd0] sm:$0xff]
    %v70 = vld [vmem:[#allocation2 + $0xd8] sm:$0xff]
    %v71 = vld [vmem:[#allocation2 + $0xe0] sm:$0xff]
    %v72 = vld [vmem:[#allocation2 + $0xe8] sm:$0xff]
    %v73 = vld [vmem:[#allocation2 + $0xf0] sm:$0xff]
    %v74 = vld [vmem:[#allocation2 + $0xf8] sm:$0xff]
    %v75 = vld [vmem:[#allocation2 + $0x100] sm:$0xff]
    %v76 = vld [vmem:[#allocation2 + $0x108] sm:$0xff]
    %v77 = vld [vmem:[#allocation2 + $0x110] sm:$0xff]
    %v78 = vld [vmem:[#allocation2 + $0x118] sm:$0xff]
    %v79 = vld [vmem:[#allocation2 + $0x120] sm:$0xff]
    %v80 = vld [vmem:[#allocation2 + $0x128] sm:$0xff]
    %v81 = vld [vmem:[#allocation2 + $0x130] sm:$0xff]
    %v82 = vld [vmem:[#allocation2 + $0x138] sm:$0xff]
    %v83 = vld [vmem:[#allocation2 + $0x140] sm:$0xff]
    %v84 = vld [vmem:[#allocation2 + $0x148] sm:$0xff]
    %v85 = vld [vmem:[#allocation2 + $0x150] sm:$0xff]
    %v86 = vld [vmem:[#allocation2 + $0x158] sm:$0xff]
    %v87 = vld [vmem:[#allocation2 + $0x160] sm:$0xff]
    %v88 = vld [vmem:[#allocation2 + $0x168] sm:$0xff]
    %v89 = vld [vmem:[#allocation2 + $0x170] sm:$0xff]
    %v90 = vld [vmem:[#allocation2 + $0x178] sm:$0xff]
    %v91 = vld [vmem:[#allocation2 + $0x180] sm:$0xff]
    %v92 = vld [vmem:[#allocation2 + $0x188] sm:$0xff]
    %v93 = vld [vmem:[#allocation2 + $0x190] sm:$0xff]
    %v94 = vld [vmem:[#allocation2 + $0x198] sm:$0xff]
    %v95 = vld [vmem:[#allocation2 + $0x1a0] sm:$0xff]
    %v96 = vld [vmem:[#allocation2 + $0x1a8] sm:$0xff]
    %v97 = vld [vmem:[#allocation2 + $0x1b0] sm:$0xff]
    %v98 = vld [vmem:[#allocation2 + $0x1b8] sm:$0xff]
    %v99 = vld [vmem:[#allocation2 + $0x1c0] sm:$0xff]
    %v100 = vld [vmem:[#allocation2 + $0x1c8] sm:$0xff]
    %v101 = vld [vmem:[#allocation2 + $0x1d0] sm:$0xff]
    %v102 = vld [vmem:[#allocation2 + $0x1d8] sm:$0xff]
    %v103 = vld [vmem:[#allocation2 + $0x1e0] sm:$0xff]
    %v104 = vld [vmem:[#allocation2 + $0x1e8] sm:$0xff]
    %v105 = vld [vmem:[#allocation2 + $0x1f0] sm:$0xff]
    %v106 = vld [vmem:[#allocation2 + $0x1f8] sm:$0xff]
    %v107 = vadd.f32 %v43, %v59
    %v108 = vrot.slane %v107, 4
    %v109 = vadd.f32 %v107, %v108
    %v110 = vrot.slane %v109, 2
    %v111 = vadd.f32 %v109, %v110
    %v112 = vrot.slane %v111, 1
    %v113 = vadd.f32 %v111, %v112
    %v114 = vadd.f32 %v44, %v60
    %v115 = vrot.slane %v114, 4
    %v116 = vadd.f32 %v114, %v115
    %v117 = vrot.slane %v116, 2
    %v118 = vadd.f32 %v116, %v117
    %v119 = vrot.slane %v118, 1
    %v120 = vadd.f32 %v118, %v119
    %v121 = vadd.f32 %v45, %v61
    %v122 = vrot.slane %v121, 4
    %v123 = vadd.f32 %v121, %v122
    %v124 = vrot.slane %v123, 2
    %v125 = vadd.f32 %v123, %v124
    %v126 = vrot.slane %v125, 1
    %v127 = vadd.f32 %v125, %v126
    %v128 = vadd.f32 %v46, %v62
    %v129 = vrot.slane %v128, 4
    %v130 = vadd.f32 %v128, %v129
    %v131 = vrot.slane %v130, 2
    %v132 = vadd.f32 %v130, %v131
    %v133 = vrot.slane %v132, 1
    %v134 = vadd.f32 %v132, %v133
    %v135 = vadd.f32 %v47, %v63
    %v136 = vrot.slane %v135, 4
    %v137 = vadd.f32 %v135, %v136
    %v138 = vrot.slane %v137, 2
    %v139 = vadd.f32 %v137, %v138
    %v140 = vrot.slane %v139, 1
    %v141 = vadd.f32 %v139, %v140
    %v142 = vadd.f32 %v48, %v64
    %v143 = vrot.slane %v142, 4
    %v144 = vadd.f32 %v142, %v143
    %v145 = vrot.slane %v144, 2
    %v146 = vadd.f32 %v144, %v145
    %v147 = vrot.slane %v146, 1
    %v148 = vadd.f32 %v146, %v147
    %v149 = vadd.f32 %v49, %v65
    %v150 = vrot.slane %v149, 4
    %v151 = vadd.f32 %v149, %v150
    %v152 = vrot.slane %v151, 2
    %v153 = vadd.f32 %v151, %v152
    %v154 = vrot.slane %v153, 1
    %v155 = vadd.f32 %v153, %v154
    %v156 = vadd.f32 %v50, %v66
    %v157 = vrot.slane %v156, 4
    %v158 = vadd.f32 %v156, %v157
    %v159 = vrot.slane %v158, 2
    %v160 = vadd.f32 %v158, %v159
    %v161 = vrot.slane %v160, 1
    %v162 = vadd.f32 %v160, %v161
    %v163 = vadd.f32 %v51, %v67
    %v164 = vrot.slane %v163, 4
    %v165 = vadd.f32 %v163, %v164
    %v166 = vrot.slane %v165, 2
    %v167 = vadd.f32 %v165, %v166
    %v168 = vrot.slane %v167, 1
    %v169 = vadd.f32 %v167, %v168
    %v170 = vadd.f32 %v52, %v68
    %v171 = vrot.slane %v170, 4
    %v172 = vadd.f32 %v170, %v171
    %v173 = vrot.slane %v172, 2
    %v174 = vadd.f32 %v172, %v173
    %v175 = vrot.slane %v174, 1
    %v176 = vadd.f32 %v174, %v175
    %v177 = vadd.f32 %v53, %v69
    %v178 = vrot.slane %v177, 4
    %v179 = vadd.f32 %v177, %v178
    %v180 = vrot.slane %v179, 2
    %v181 = vadd.f32 %v179, %v180
    %v182 = vrot.slane %v181, 1
    %v183 = vadd.f32 %v181, %v182
    %v184 = vadd.f32 %v54, %v70
    %v185 = vrot.slane %v184, 4
    %v186 = vadd.f32 %v184, %v185
    %v187 = vrot.slane %v186, 2
    %v188 = vadd.f32 %v186, %v187
    %v189 = vrot.slane %v188, 1
    %v190 = vadd.f32 %v188, %v189
    %v191 = vadd.f32 %v55, %v71
    %v192 = vrot.slane %v191, 4
    %v193 = vadd.f32 %v191, %v192
    %v194 = vrot.slane %v193, 2
    %v195 = vadd.f32 %v193, %v194
    %v196 = vrot.slane %v195, 1
    %v197 = vadd.f32 %v195, %v196
    %v198 = vadd.f32 %v56, %v72
    %v199 = vrot.slane %v198, 4
    %v200 = vadd.f32 %v198, %v199
    %v201 = vrot.slane %v200, 2
    %v202 = vadd.f32 %v200, %v201
    %v203 = vrot.slane %v202, 1
    %v204 = vadd.f32 %v202, %v203
    %v205 = vadd.f32 %v57, %v73
    %v206 = vrot.slane %v205, 4
    %v207 = vadd.f32 %v205, %v206
    %v208 = vrot.slane %v207, 2
    %v209 = vadd.f32 %v207, %v208
    %v210 = vrot.slane %v209, 1
    %v211 = vadd.f32 %v209, %v210
    %v212 = vadd.f32 %v58, %v74
    %v213 = vrot.slane %v212, 4
    %v214 = vadd.f32 %v212, %v213
    %v215 = vrot.slane %v214, 2
    %v216 = vadd.f32 %v214, %v215
    %v217 = vrot.slane %v216, 1
    %v218 = vadd.f32 %v216, %v217
    %v219 = vadd.f32 %v75, %v91
    %v220 = vrot.slane %v219, 4
    %v221 = vadd.f32 %v219, %v220
    %v222 = vrot.slane %v221, 2
    %v223 = vadd.f32 %v221, %v222
    %v224 = vrot.slane %v223, 1
    %v225 = vadd.f32 %v223, %v224
    %v226 = vadd.f32 %v76, %v92
    %v227 = vrot.slane %v226, 4
    %v228 = vadd.f32 %v226, %v227
    %v229 = vrot.slane %v228, 2
    %v230 = vadd.f32 %v228, %v229
    %v231 = vrot.slane %v230, 1
    %v232 = vadd.f32 %v230, %v231
    %v233 = vadd.f32 %v77, %v93
    %v234 = vrot.slane %v233, 4
    %v235 = vadd.f32 %v233, %v234
    %v236 = vrot.slane %v235, 2
    %v237 = vadd.f32 %v235, %v236
    %v238 = vrot.slane %v237, 1
    %v239 = vadd.f32 %v237, %v238
    %v240 = vadd.f32 %v78, %v94
    %v241 = vrot.slane %v240, 4
    %v242 = vadd.f32 %v240, %v241
    %v243 = vrot.slane %v242, 2
    %v244 = vadd.f32 %v242, %v243
    %v245 = vrot.slane %v244, 1
    %v246 = vadd.f32 %v244, %v245
    %v247 = vadd.f32 %v79, %v95
    %v248 = vrot.slane %v247, 4
    %v249 = vadd.f32 %v247, %v248
    %v250 = vrot.slane %v249, 2
    %v251 = vadd.f32 %v249, %v250
    %v252 = vrot.slane %v251, 1
    %v253 = vadd.f32 %v251, %v252
    %v254 = vadd.f32 %v80, %v96
    %v255 = vrot.slane %v254, 4
    %v256 = vadd.f32 %v254, %v255
    %v257 = vrot.slane %v256, 2
    %v258 = vadd.f32 %v256, %v257
    %v259 = vrot.slane %v258, 1
    %v260 = vadd.f32 %v258, %v259
    %v261 = vadd.f32 %v81, %v97
    %v262 = vrot.slane %v261, 4
    %v263 = vadd.f32 %v261, %v262
    %v264 = vrot.slane %v263, 2
    %v265 = vadd.f32 %v263, %v264
    %v266 = vrot.slane %v265, 1
    %v267 = vadd.f32 %v265, %v266
    %v268 = vadd.f32 %v82, %v98
    %v269 = vrot.slane %v268, 4
    %v270 = vadd.f32 %v268, %v269
    %v271 = vrot.slane %v270, 2
    %v272 = vadd.f32 %v270, %v271
    %v273 = vrot.slane %v272, 1
    %v274 = vadd.f32 %v272, %v273
    %v275 = vadd.f32 %v83, %v99
    %v276 = vrot.slane %v275, 4
    %v277 = vadd.f32 %v275, %v276
    %v278 = vrot.slane %v277, 2
    %v279 = vadd.f32 %v277, %v278
    %v280 = vrot.slane %v279, 1
    %v281 = vadd.f32 %v279, %v280
    %v282 = vadd.f32 %v84, %v100
    %v283 = vrot.slane %v282, 4
    %v284 = vadd.f32 %v282, %v283
    %v285 = vrot.slane %v284, 2
    %v286 = vadd.f32 %v284, %v285
    %v287 = vrot.slane %v286, 1
    %v288 = vadd.f32 %v286, %v287
    %v289 = vadd.f32 %v85, %v101
    %v290 = vrot.slane %v289, 4
    %v291 = vadd.f32 %v289, %v290
    %v292 = vrot.slane %v291, 2
    %v293 = vadd.f32 %v291, %v292
    %v294 = vrot.slane %v293, 1
    %v295 = vadd.f32 %v293, %v294
    %v296 = vadd.f32 %v86, %v102
    %v297 = vrot.slane %v296, 4
    %v298 = vadd.f32 %v296, %v297
    %v299 = vrot.slane %v298, 2
    %v300 = vadd.f32 %v298, %v299
    %v301 = vrot.slane %v300, 1
    %v302 = vadd.f32 %v300, %v301
    %v303 = vadd.f32 %v87, %v103
    %v304 = vrot.slane %v303, 4
    %v305 = vadd.f32 %v303, %v304
    %v306 = vrot.slane %v305, 2
    %v307 = vadd.f32 %v305, %v306
    %v308 = vrot.slane %v307, 1
    %v309 = vadd.f32 %v307, %v308
    %v310 = vadd.f32 %v88, %v104
    %v311 = vrot.slane %v310, 4
    %v312 = vadd.f32 %v310, %v311
    %v313 = vrot.slane %v312, 2
    %v314 = vadd.f32 %v312, %v313
    %v315 = vrot.slane %v314, 1
    %v316 = vadd.f32 %v314, %v315
    %v317 = vadd.f32 %v89, %v105
    %v318 = vrot.slane %v317, 4
    %v319 = vadd.f32 %v317, %v318
    %v320 = vrot.slane %v319, 2
    %v321 = vadd.f32 %v319, %v320
    %v322 = vrot.slane %v321, 1
    %v323 = vadd.f32 %v321, %v322
    %v324 = vadd.f32 %v90, %v106
    %v325 = vrot.slane %v324, 4
    %v326 = vadd.f32 %v324, %v325
    %v327 = vrot.slane %v326, 2
    %v328 = vadd.f32 %v326, %v327
    %v329 = vrot.slane %v328, 1
    %v330 = vadd.f32 %v328, %v329
    %v331 = vld [vmem:[#allocation5] sm:$0xff]
    %v332 = vld [vmem:[#allocation5 + $0x8] sm:$0xff]
    %v333 = vld [vmem:[#allocation5 + $0x10] sm:$0xff]
    %v334 = vld [vmem:[#allocation5 + $0x18] sm:$0xff]
    %v335 = vld [vmem:[#allocation5 + $0x20] sm:$0xff]
    %v336 = vld [vmem:[#allocation5 + $0x28] sm:$0xff]
    %v337 = vld [vmem:[#allocation5 + $0x30] sm:$0xff]
    %v338 = vld [vmem:[#allocation5 + $0x38] sm:$0xff]
    %v339 = vld [vmem:[#allocation5 + $0x40] sm:$0xff]
    %v340 = vld [vmem:[#allocation5 + $0x48] sm:$0xff]
    %v341 = vld [vmem:[#allocation5 + $0x50] sm:$0xff]
    %v342 = vld [vmem:[#allocation5 + $0x58] sm:$0xff]
    %v343 = vld [vmem:[#allocation5 + $0x60] sm:$0xff]
    %v344 = vld [vmem:[#allocation5 + $0x68] sm:$0xff]
    %v345 = vld [vmem:[#allocation5 + $0x70] sm:$0xff]
    %v346 = vld [vmem:[#allocation5 + $0x78] sm:$0xff]
    %v347 = vld [vmem:[#allocation5 + $0x80] sm:$0xff]
    %v348 = vld [vmem:[#allocation5 + $0x88] sm:$0xff]
    %v349 = vld [vmem:[#allocation5 + $0x90] sm:$0xff]
    %v350 = vld [vmem:[#allocation5 + $0x98] sm:$0xff]
    %v351 = vld [vmem:[#allocation5 + $0xa0] sm:$0xff]
    %v352 = vld [vmem:[#allocation5 + $0xa8] sm:$0xff]
    %v353 = vld [vmem:[#allocation5 + $0xb0] sm:$0xff]
    %v354 = vld [vmem:[#allocation5 + $0xb8] sm:$0xff]
    %v355 = vld [vmem:[#allocation5 + $0xc0] sm:$0xff]
    %v356 = vld [vmem:[#allocation5 + $0xc8] sm:$0xff]
    %v357 = vld [vmem:[#allocation5 + $0xd0] sm:$0xff]
    %v358 = vld [vmem:[#allocation5 + $0xd8] sm:$0xff]
    %v359 = vld [vmem:[#allocation5 + $0xe0] sm:$0xff]
    %v360 = vld [vmem:[#allocation5 + $0xe8] sm:$0xff]
    %v361 = vld [vmem:[#allocation5 + $0xf0] sm:$0xff]
    %v362 = vld [vmem:[#allocation5 + $0xf8] sm:$0xff]
    %v363 = vld [vmem:[#allocation5 + $0x100] sm:$0xff]
    %v364 = vld [vmem:[#allocation5 + $0x108] sm:$0xff]
    %v365 = vld [vmem:[#allocation5 + $0x110] sm:$0xff]
    %v366 = vld [vmem:[#allocation5 + $0x118] sm:$0xff]
    %v367 = vld [vmem:[#allocation5 + $0x120] sm:$0xff]
    %v368 = vld [vmem:[#allocation5 + $0x128] sm:$0xff]
    %v369 = vld [vmem:[#allocation5 + $0x130] sm:$0xff]
    %v370 = vld [vmem:[#allocation5 + $0x138] sm:$0xff]
    %v371 = vld [vmem:[#allocation5 + $0x140] sm:$0xff]
    %v372 = vld [vmem:[#allocation5 + $0x148] sm:$0xff]
    %v373 = vld [vmem:[#allocation5 + $0x150] sm:$0xff]
    %v374 = vld [vmem:[#allocation5 + $0x158] sm:$0xff]
    %v375 = vld [vmem:[#allocation5 + $0x160] sm:$0xff]
    %v376 = vld [vmem:[#allocation5 + $0x168] sm:$0xff]
    %v377 = vld [vmem:[#allocation5 + $0x170] sm:$0xff]
    %v378 = vld [vmem:[#allocation5 + $0x178] sm:$0xff]
    %v379 = vld [vmem:[#allocation5 + $0x180] sm:$0xff]
    %v380 = vld [vmem:[#allocation5 + $0x188] sm:$0xff]
    %v381 = vld [vmem:[#allocation5 + $0x190] sm:$0xff]
    %v382 = vld [vmem:[#allocation5 + $0x198] sm:$0xff]
    %v383 = vld [vmem:[#allocation5 + $0x1a0] sm:$0xff]
    %v384 = vld [vmem:[#allocation5 + $0x1a8] sm:$0xff]
    %v385 = vld [vmem:[#allocation5 + $0x1b0] sm:$0xff]
    %v386 = vld [vmem:[#allocation5 + $0x1b8] sm:$0xff]
    %v387 = vld [vmem:[#allocation5 + $0x1c0] sm:$0xff]
    %v388 = vld [vmem:[#allocation5 + $0x1c8] sm:$0xff]
    %v389 = vld [vmem:[#allocation5 + $0x1d0] sm:$0xff]
    %v390 = vld [vmem:[#allocation5 + $0x1d8] sm:$0xff]
    %v391 = vld [vmem:[#allocation5 + $0x1e0] sm:$0xff]
    %v392 = vld [vmem:[#allocation5 + $0x1e8] sm:$0xff]
    %v393 = vld [vmem:[#allocation5 + $0x1f0] sm:$0xff]
    %v394 = vld [vmem:[#allocation5 + $0x1f8] sm:$0xff]
    %v395 = vld [vmem:[#allocation5 + $0x200] sm:$0xff]
    %v396 = vld [vmem:[#allocation5 + $0x208] sm:$0xff]
    %v397 = vld [vmem:[#allocation5 + $0x210] sm:$0xff]
    %v398 = vld [vmem:[#allocation5 + $0x218] sm:$0xff]
    %v399 = vld [vmem:[#allocation5 + $0x220] sm:$0xff]
    %v400 = vld [vmem:[#allocation5 + $0x228] sm:$0xff]
    %v401 = vld [vmem:[#allocation5 + $0x230] sm:$0xff]
    %v402 = vld [vmem:[#allocation5 + $0x238] sm:$0xff]
    %v403 = vld [vmem:[#allocation5 + $0x240] sm:$0xff]
    %v404 = vld [vmem:[#allocation5 + $0x248] sm:$0xff]
    %v405 = vld [vmem:[#allocation5 + $0x250] sm:$0xff]
    %v406 = vld [vmem:[#allocation5 + $0x258] sm:$0xff]
    %v407 = vld [vmem:[#allocation5 + $0x260] sm:$0xff]
    %v408 = vld [vmem:[#allocation5 + $0x268] sm:$0xff]
    %v409 = vld [vmem:[#allocation5 + $0x270] sm:$0xff]
    %v410 = vld [vmem:[#allocation5 + $0x278] sm:$0xff]
    %v411 = vld [vmem:[#allocation5 + $0x280] sm:$0xff]
    %v412 = vld [vmem:[#allocation5 + $0x288] sm:$0xff]
    %v413 = vld [vmem:[#allocation5 + $0x290] sm:$0xff]
    %v414 = vld [vmem:[#allocation5 + $0x298] sm:$0xff]
    %v415 = vld [vmem:[#allocation5 + $0x2a0] sm:$0xff]
    %v416 = vld [vmem:[#allocation5 + $0x2a8] sm:$0xff]
    %v417 = vld [vmem:[#allocation5 + $0x2b0] sm:$0xff]
    %v418 = vld [vmem:[#allocation5 + $0x2b8] sm:$0xff]
    %v419 = vld [vmem:[#allocation5 + $0x2c0] sm:$0xff]
    %v420 = vld [vmem:[#allocation5 + $0x2c8] sm:$0xff]
    %v421 = vld [vmem:[#allocation5 + $0x2d0] sm:$0xff]
    %v422 = vld [vmem:[#allocation5 + $0x2d8] sm:$0xff]
    %v423 = vld [vmem:[#allocation5 + $0x2e0] sm:$0xff]
    %v424 = vld [vmem:[#allocation5 + $0x2e8] sm:$0xff]
    %v425 = vld [vmem:[#allocation5 + $0x2f0] sm:$0xff]
    %v426 = vld [vmem:[#allocation5 + $0x2f8] sm:$0xff]
    %v427 = vld [vmem:[#allocation5 + $0x300] sm:$0xff]
    %v428 = vld [vmem:[#allocation5 + $0x308] sm:$0xff]
    %v429 = vld [vmem:[#allocation5 + $0x310] sm:$0xff]
    %v430 = vld [vmem:[#allocation5 + $0x318] sm:$0xff]
    %v431 = vld [vmem:[#allocation5 + $0x320] sm:$0xff]
    %v432 = vld [vmem:[#allocation5 + $0x328] sm:$0xff]
    %v433 = vld [vmem:[#allocation5 + $0x330] sm:$0xff]
    %v434 = vld [vmem:[#allocation5 + $0x338] sm:$0xff]
    %v435 = vld [vmem:[#allocation5 + $0x340] sm:$0xff]
    %v436 = vld [vmem:[#allocation5 + $0x348] sm:$0xff]
    %v437 = vld [vmem:[#allocation5 + $0x350] sm:$0xff]
    %v438 = vld [vmem:[#allocation5 + $0x358] sm:$0xff]
    %v439 = vld [vmem:[#allocation5 + $0x360] sm:$0xff]
    %v440 = vld [vmem:[#allocation5 + $0x368] sm:$0xff]
    %v441 = vld [vmem:[#allocation5 + $0x370] sm:$0xff]
    %v442 = vld [vmem:[#allocation5 + $0x378] sm:$0xff]
    %v443 = vld [vmem:[#allocation5 + $0x380] sm:$0xff]
    %v444 = vld [vmem:[#allocation5 + $0x388] sm:$0xff]
    %v445 = vld [vmem:[#allocation5 + $0x390] sm:$0xff]
    %v446 = vld [vmem:[#allocation5 + $0x398] sm:$0xff]
    %v447 = vld [vmem:[#allocation5 + $0x3a0] sm:$0xff]
    %v448 = vld [vmem:[#allocation5 + $0x3a8] sm:$0xff]
    %v449 = vld [vmem:[#allocation5 + $0x3b0] sm:$0xff]
    %v450 = vld [vmem:[#allocation5 + $0x3b8] sm:$0xff]
    %v451 = vld [vmem:[#allocation5 + $0x3c0] sm:$0xff]
    %v452 = vld [vmem:[#allocation5 + $0x3c8] sm:$0xff]
    %v453 = vld [vmem:[#allocation5 + $0x3d0] sm:$0xff]
    %v454 = vld [vmem:[#allocation5 + $0x3d8] sm:$0xff]
    %v455 = vld [vmem:[#allocation5 + $0x3e0] sm:$0xff]
    %v456 = vld [vmem:[#allocation5 + $0x3e8] sm:$0xff]
    %v457 = vld [vmem:[#allocation5 + $0x3f0] sm:$0xff]
    %v458 = vld [vmem:[#allocation5 + $0x3f8] sm:$0xff]
    %v459 = vld [vmem:[#allocation5 + $0x400] sm:$0xff]
    %v460 = vld [vmem:[#allocation5 + $0x408] sm:$0xff]
    %v461 = vld [vmem:[#allocation5 + $0x410] sm:$0xff]
    %v462 = vld [vmem:[#allocation5 + $0x418] sm:$0xff]
    %v463 = vld [vmem:[#allocation5 + $0x420] sm:$0xff]
    %v464 = vld [vmem:[#allocation5 + $0x428] sm:$0xff]
    %v465 = vld [vmem:[#allocation5 + $0x430] sm:$0xff]
    %v466 = vld [vmem:[#allocation5 + $0x438] sm:$0xff]
    %v467 = vld [vmem:[#allocation5 + $0x440] sm:$0xff]
    %v468 = vld [vmem:[#allocation5 + $0x448] sm:$0xff]
    %v469 = vld [vmem:[#allocation5 + $0x450] sm:$0xff]
    %v470 = vld [vmem:[#allocation5 + $0x458] sm:$0xff]
    %v471 = vld [vmem:[#allocation5 + $0x460] sm:$0xff]
    %v472 = vld [vmem:[#allocation5 + $0x468] sm:$0xff]
    %v473 = vld [vmem:[#allocation5 + $0x470] sm:$0xff]
    %v474 = vld [vmem:[#allocation5 + $0x478] sm:$0xff]
    %v475 = vld [vmem:[#allocation5 + $0x480] sm:$0xff]
    %v476 = vld [vmem:[#allocation5 + $0x488] sm:$0xff]
    %v477 = vld [vmem:[#allocation5 + $0x490] sm:$0xff]
    %v478 = vld [vmem:[#allocation5 + $0x498] sm:$0xff]
    %v479 = vld [vmem:[#allocation5 + $0x4a0] sm:$0xff]
    %v480 = vld [vmem:[#allocation5 + $0x4a8] sm:$0xff]
    %v481 = vld [vmem:[#allocation5 + $0x4b0] sm:$0xff]
    %v482 = vld [vmem:[#allocation5 + $0x4b8] sm:$0xff]
    %v483 = vld [vmem:[#allocation5 + $0x4c0] sm:$0xff]
    %v484 = vld [vmem:[#allocation5 + $0x4c8] sm:$0xff]
    %v485 = vld [vmem:[#allocation5 + $0x4d0] sm:$0xff]
    %v486 = vld [vmem:[#allocation5 + $0x4d8] sm:$0xff]
    %v487 = vld [vmem:[#allocation5 + $0x4e0] sm:$0xff]
    %v488 = vld [vmem:[#allocation5 + $0x4e8] sm:$0xff]
    %v489 = vld [vmem:[#allocation5 + $0x4f0] sm:$0xff]
    %v490 = vld [vmem:[#allocation5 + $0x4f8] sm:$0xff]
    %v491 = vld [vmem:[#allocation5 + $0x500] sm:$0xff]
    %v492 = vld [vmem:[#allocation5 + $0x508] sm:$0xff]
    %v493 = vld [vmem:[#allocation5 + $0x510] sm:$0xff]
    %v494 = vld [vmem:[#allocation5 + $0x518] sm:$0xff]
    %v495 = vld [vmem:[#allocation5 + $0x520] sm:$0xff]
    %v496 = vld [vmem:[#allocation5 + $0x528] sm:$0xff]
    %v497 = vld [vmem:[#allocation5 + $0x530] sm:$0xff]
    %v498 = vld [vmem:[#allocation5 + $0x538] sm:$0xff]
    %v499 = vld [vmem:[#allocation5 + $0x540] sm:$0xff]
    %v500 = vld [vmem:[#allocation5 + $0x548] sm:$0xff]
    %v501 = vld [vmem:[#allocation5 + $0x550] sm:$0xff]
    %v502 = vld [vmem:[#allocation5 + $0x558] sm:$0xff]
    %v503 = vld [vmem:[#allocation5 + $0x560] sm:$0xff]
    %v504 = vld [vmem:[#allocation5 + $0x568] sm:$0xff]
    %v505 = vld [vmem:[#allocation5 + $0x570] sm:$0xff]
    %v506 = vld [vmem:[#allocation5 + $0x578] sm:$0xff]
    %v507 = vld [vmem:[#allocation5 + $0x580] sm:$0xff]
    %v508 = vld [vmem:[#allocation5 + $0x588] sm:$0xff]
    %v509 = vld [vmem:[#allocation5 + $0x590] sm:$0xff]
    %v510 = vld [vmem:[#allocation5 + $0x598] sm:$0xff]
    %v511 = vld [vmem:[#allocation5 + $0x5a0] sm:$0xff]
    %v512 = vld [vmem:[#allocation5 + $0x5a8] sm:$0xff]
    %v513 = vld [vmem:[#allocation5 + $0x5b0] sm:$0xff]
    %v514 = vld [vmem:[#allocation5 + $0x5b8] sm:$0xff]
    %v515 = vld [vmem:[#allocation5 + $0x5c0] sm:$0xff]
    %v516 = vld [vmem:[#allocation5 + $0x5c8] sm:$0xff]
    %v517 = vld [vmem:[#allocation5 + $0x5d0] sm:$0xff]
    %v518 = vld [vmem:[#allocation5 + $0x5d8] sm:$0xff]
    %v519 = vld [vmem:[#allocation5 + $0x5e0] sm:$0xff]
    %v520 = vld [vmem:[#allocation5 + $0x5e8] sm:$0xff]
    %v521 = vld [vmem:[#allocation5 + $0x5f0] sm:$0xff]
    %v522 = vld [vmem:[#allocation5 + $0x5f8] sm:$0xff]
    %v523 = vld [vmem:[#allocation5 + $0x600] sm:$0xff]
    %v524 = vld [vmem:[#allocation5 + $0x608] sm:$0xff]
    %v525 = vld [vmem:[#allocation5 + $0x610] sm:$0xff]
    %v526 = vld [vmem:[#allocation5 + $0x618] sm:$0xff]
    %v527 = vld [vmem:[#allocation5 + $0x620] sm:$0xff]
    %v528 = vld [vmem:[#allocation5 + $0x628] sm:$0xff]
    %v529 = vld [vmem:[#allocation5 + $0x630] sm:$0xff]
    %v530 = vld [vmem:[#allocation5 + $0x638] sm:$0xff]
    %v531 = vld [vmem:[#allocation5 + $0x640] sm:$0xff]
    %v532 = vld [vmem:[#allocation5 + $0x648] sm:$0xff]
    %v533 = vld [vmem:[#allocation5 + $0x650] sm:$0xff]
    %v534 = vld [vmem:[#allocation5 + $0x658] sm:$0xff]
    %v535 = vld [vmem:[#allocation5 + $0x660] sm:$0xff]
    %v536 = vld [vmem:[#allocation5 + $0x668] sm:$0xff]
    %v537 = vld [vmem:[#allocation5 + $0x670] sm:$0xff]
    %v538 = vld [vmem:[#allocation5 + $0x678] sm:$0xff]
    %v539 = vld [vmem:[#allocation5 + $0x680] sm:$0xff]
    %v540 = vld [vmem:[#allocation5 + $0x688] sm:$0xff]
    %v541 = vld [vmem:[#allocation5 + $0x690] sm:$0xff]
    %v542 = vld [vmem:[#allocation5 + $0x698] sm:$0xff]
    %v543 = vld [vmem:[#allocation5 + $0x6a0] sm:$0xff]
    %v544 = vld [vmem:[#allocation5 + $0x6a8] sm:$0xff]
    %v545 = vld [vmem:[#allocation5 + $0x6b0] sm:$0xff]
    %v546 = vld [vmem:[#allocation5 + $0x6b8] sm:$0xff]
    %v547 = vld [vmem:[#allocation5 + $0x6c0] sm:$0xff]
    %v548 = vld [vmem:[#allocation5 + $0x6c8] sm:$0xff]
    %v549 = vld [vmem:[#allocation5 + $0x6d0] sm:$0xff]
    %v550 = vld [vmem:[#allocation5 + $0x6d8] sm:$0xff]
    %v551 = vld [vmem:[#allocation5 + $0x6e0] sm:$0xff]
    %v552 = vld [vmem:[#allocation5 + $0x6e8] sm:$0xff]
    %v553 = vld [vmem:[#allocation5 + $0x6f0] sm:$0xff]
    %v554 = vld [vmem:[#allocation5 + $0x6f8] sm:$0xff]
    %v555 = vld [vmem:[#allocation5 + $0x700] sm:$0xff]
    %v556 = vld [vmem:[#allocation5 + $0x708] sm:$0xff]
    %v557 = vld [vmem:[#allocation5 + $0x710] sm:$0xff]
    %v558 = vld [vmem:[#allocation5 + $0x718] sm:$0xff]
    %v559 = vld [vmem:[#allocation5 + $0x720] sm:$0xff]
    %v560 = vld [vmem:[#allocation5 + $0x728] sm:$0xff]
    %v561 = vld [vmem:[#allocation5 + $0x730] sm:$0xff]
    %v562 = vld [vmem:[#allocation5 + $0x738] sm:$0xff]
    %v563 = vld [vmem:[#allocation5 + $0x740] sm:$0xff]
    %v564 = vld [vmem:[#allocation5 + $0x748] sm:$0xff]
    %v565 = vld [vmem:[#allocation5 + $0x750] sm:$0xff]
    %v566 = vld [vmem:[#allocation5 + $0x758] sm:$0xff]
    %v567 = vld [vmem:[#allocation5 + $0x760] sm:$0xff]
    %v568 = vld [vmem:[#allocation5 + $0x768] sm:$0xff]
    %v569 = vld [vmem:[#allocation5 + $0x770] sm:$0xff]
    %v570 = vld [vmem:[#allocation5 + $0x778] sm:$0xff]
    %v571 = vld [vmem:[#allocation5 + $0x780] sm:$0xff]
    %v572 = vld [vmem:[#allocation5 + $0x788] sm:$0xff]
    %v573 = vld [vmem:[#allocation5 + $0x790] sm:$0xff]
    %v574 = vld [vmem:[#allocation5 + $0x798] sm:$0xff]
    %v575 = vld [vmem:[#allocation5 + $0x7a0] sm:$0xff]
    %v576 = vld [vmem:[#allocation5 + $0x7a8] sm:$0xff]
    %v577 = vld [vmem:[#allocation5 + $0x7b0] sm:$0xff]
    %v578 = vld [vmem:[#allocation5 + $0x7b8] sm:$0xff]
    %v579 = vld [vmem:[#allocation5 + $0x7c0] sm:$0xff]
    %v580 = vld [vmem:[#allocation5 + $0x7c8] sm:$0xff]
    %v581 = vld [vmem:[#allocation5 + $0x7d0] sm:$0xff]
    %v582 = vld [vmem:[#allocation5 + $0x7d8] sm:$0xff]
    %v583 = vld [vmem:[#allocation5 + $0x7e0] sm:$0xff]
    %v584 = vld [vmem:[#allocation5 + $0x7e8] sm:$0xff]
    %v585 = vld [vmem:[#allocation5 + $0x7f0] sm:$0xff]
    %v586 = vld [vmem:[#allocation5 + $0x7f8] sm:$0xff]
    %vm619 = vcmask 1041409
    %v620 = vsel %vm619, %v225, %v113
    %v621 = vsel %vm619, %v232, %v120
    %v622 = vsel %vm619, %v239, %v127
    %v623 = vsel %vm619, %v246, %v134
    %v624 = vsel %vm619, %v253, %v141
    %v625 = vsel %vm619, %v260, %v148
    %v626 = vsel %vm619, %v267, %v155
    %v627 = vsel %vm619, %v274, %v162
    %v628 = vsel %vm619, %v281, %v169
    %v629 = vsel %vm619, %v288, %v176
    %v630 = vsel %vm619, %v295, %v183
    %v631 = vsel %vm619, %v302, %v190
    %v632 = vsel %vm619, %v309, %v197
    %v633 = vsel %vm619, %v316, %v204
    %v634 = vsel %vm619, %v323, %v211
    %v635 = vsel %vm619, %v330, %v218
    %652 = vmatprep.subr.mxu0 0.0
    %653 = vmatpush1.msra.mxu0 %v346
    %654 = vmatprep.subr.mxu0 0.0
    %655 = vmatpush1.msra.mxu0 %v345
    %656 = vmatprep.subr.mxu0 0.0
    %657 = vmatpush1.msra.mxu0 %v344
    %658 = vmatprep.subr.mxu0 0.0
    %659 = vmatpush1.msra.mxu0 %v343
    %660 = vmatprep.subr.mxu0 0.0
    %661 = vmatpush1.msra.mxu0 %v342
    %662 = vmatprep.subr.mxu0 0.0
    %663 = vmatpush1.msra.mxu0 %v341
    %664 = vmatprep.subr.mxu0 0.0
    %665 = vmatpush1.msra.mxu0 %v340
    %666 = vmatprep.subr.mxu0 0.0
    %667 = vmatpush1.msra.mxu0 %v339
    %668 = vmatprep.subr.mxu0 0.0
    %669 = vmatpush1.msra.mxu0 %v338
    %670 = vmatprep.subr.mxu0 0.0
    %671 = vmatpush1.msra.mxu0 %v337
    %672 = vmatprep.subr.mxu0 0.0
    %673 = vmatpush1.msra.mxu0 %v336
    %674 = vmatprep.subr.mxu0 0.0
    %675 = vmatpush1.msra.mxu0 %v335
    %676 = vmatprep.subr.mxu0 0.0
    %677 = vmatpush1.msra.mxu0 %v334
    %678 = vmatprep.subr.mxu0 0.0
    %679 = vmatpush1.msra.mxu0 %v333
    %680 = vmatprep.subr.mxu0 0.0
    %681 = vmatpush1.msra.mxu0 %v332
    %682 = vmatprep.subr.mxu0 0.0
    %683 = vmatpush1.msra.mxu0 %v331
    %684 = vmatprep.subr.mxu0 0.0
    %685 = vmatpush2.msra.mxu0 %v362
    %686 = vmatprep.subr.mxu0 0.0
    %687 = vmatpush2.msra.mxu0 %v361
    %688 = vmatprep.subr.mxu0 0.0
    %689 = vmatpush2.msra.mxu0 %v360
    %690 = vmatprep.subr.mxu0 0.0
    %691 = vmatpush2.msra.mxu0 %v359
    %692 = vmatprep.subr.mxu0 0.0
    %693 = vmatpush2.msra.mxu0 %v358
    %694 = vmatprep.subr.mxu0 0.0
    %695 = vmatpush2.msra.mxu0 %v357
    %696 = vmatprep.subr.mxu0 0.0
    %697 = vmatpush2.msra.mxu0 %v356
    %698 = vmatprep.subr.mxu0 0.0
    %699 = vmatpush2.msra.mxu0 %v355
    %700 = vmatprep.subr.mxu0 0.0
    %701 = vmatpush2.msra.mxu0 %v354
    %702 = vmatprep.subr.mxu0 0.0
    %703 = vmatpush2.msra.mxu0 %v353
    %704 = vmatprep.subr.mxu0 0.0
    %705 = vmatpush2.msra.mxu0 %v352
    %706 = vmatprep.subr.mxu0 0.0
    %707 = vmatpush2.msra.mxu0 %v351
    %708 = vmatprep.subr.mxu0 0.0
    %709 = vmatpush2.msra.mxu0 %v350
    %710 = vmatprep.subr.mxu0 0.0
    %711 = vmatpush2.msra.mxu0 %v349
    %712 = vmatprep.subr.mxu0 0.0
    %713 = vmatpush2.msra.mxu0 %v348
    %714 = vmatprep.subr.mxu0 0.0
    %715 = vmatpush2.msra.mxu0 %v347
    %716 = vmatprep.mubr.f32.mxu0 %v621
    %717 = vmatmul.mubr.f32.gmra.mxu0 %v620
    %v718 = vpop.f32.mrf.mxu0
    %v719 = vadd.f32 0.0, %v718
    %v720 = vpop.f32.mrf.mxu0
    %721 = vdwg.mxu0
    %722 = vmatprep.subr.mxu0 0.0
    %723 = vmatpush1.msra.mxu0 %v378
    %724 = vmatprep.subr.mxu0 0.0
    %725 = vmatpush1.msra.mxu0 %v377
    %726 = vmatprep.subr.mxu0 0.0
    %727 = vmatpush1.msra.mxu0 %v376
    %728 = vmatprep.subr.mxu0 0.0
    %729 = vmatpush1.msra.mxu0 %v375
    %730 = vmatprep.subr.mxu0 0.0
    %731 = vmatpush1.msra.mxu0 %v374
    %732 = vmatprep.subr.mxu0 0.0
    %733 = vmatpush1.msra.mxu0 %v373
    %734 = vmatprep.subr.mxu0 0.0
    %735 = vmatpush1.msra.mxu0 %v372
    %736 = vmatprep.subr.mxu0 0.0
    %737 = vmatpush1.msra.mxu0 %v371
    %738 = vmatprep.subr.mxu0 0.0
    %739 = vmatpush1.msra.mxu0 %v370
    %740 = vmatprep.subr.mxu0 0.0
    %741 = vmatpush1.msra.mxu0 %v369
    %742 = vmatprep.subr.mxu0 0.0
    %743 = vmatpush1.msra.mxu0 %v368
    %744 = vmatprep.subr.mxu0 0.0
    %745 = vmatpush1.msra.mxu0 %v367
    %746 = vmatprep.subr.mxu0 0.0
    %747 = vmatpush1.msra.mxu0 %v366
    %748 = vmatprep.subr.mxu0 0.0
    %749 = vmatpush1.msra.mxu0 %v365
    %750 = vmatprep.subr.mxu0 0.0
    %751 = vmatpush1.msra.mxu0 %v364
    %752 = vmatprep.subr.mxu0 0.0
    %753 = vmatpush1.msra.mxu0 %v363
    %754 = vmatprep.subr.mxu0 0.0
    %755 = vmatpush2.msra.mxu0 %v394
    %756 = vmatprep.subr.mxu0 0.0
    %757 = vmatpush2.msra.mxu0 %v393
    %758 = vmatprep.subr.mxu0 0.0
    %759 = vmatpush2.msra.mxu0 %v392
    %760 = vmatprep.subr.mxu0 0.0
    %761 = vmatpush2.msra.mxu0 %v391
    %762 = vmatprep.subr.mxu0 0.0
    %763 = vmatpush2.msra.mxu0 %v390
    %764 = vmatprep.subr.mxu0 0.0
    %765 = vmatpush2.msra.mxu0 %v389
    %766 = vmatprep.subr.mxu0 0.0
    %767 = vmatpush2.msra.mxu0 %v388
    %768 = vmatprep.subr.mxu0 0.0
    %769 = vmatpush2.msra.mxu0 %v387
    %770 = vmatprep.subr.mxu0 0.0
    %771 = vmatpush2.msra.mxu0 %v386
    %772 = vmatprep.subr.mxu0 0.0
    %773 = vmatpush2.msra.mxu0 %v385
    %774 = vmatprep.subr.mxu0 0.0
    %775 = vmatpush2.msra.mxu0 %v384
    %776 = vmatprep.subr.mxu0 0.0
    %777 = vmatpush2.msra.mxu0 %v383
    %778 = vmatprep.subr.mxu0 0.0
    %779 = vmatpush2.msra.mxu0 %v382
    %780 = vmatprep.subr.mxu0 0.0
    %781 = vmatpush2.msra.mxu0 %v381
    %782 = vmatprep.subr.mxu0 0.0
    %783 = vmatpush2.msra.mxu0 %v380
    %784 = vmatprep.subr.mxu0 0.0
    %785 = vmatpush2.msra.mxu0 %v379
    %786 = vmatprep.mubr.f32.mxu0 %v623
    %787 = vmatmul.mubr.f32.gmra.mxu0 %v622
    %v788 = vpop.f32.mrf.mxu0
    %v789 = vadd.f32 %v719, %v788
    %v790 = vpop.f32.mrf.mxu0
    %791 = vdwg.mxu0
    %792 = vmatprep.subr.mxu0 0.0
    %793 = vmatpush1.msra.mxu0 %v410
    %794 = vmatprep.subr.mxu0 0.0
    %795 = vmatpush1.msra.mxu0 %v409
    %796 = vmatprep.subr.mxu0 0.0
    %797 = vmatpush1.msra.mxu0 %v408
    %798 = vmatprep.subr.mxu0 0.0
    %799 = vmatpush1.msra.mxu0 %v407
    %800 = vmatprep.subr.mxu0 0.0
    %801 = vmatpush1.msra.mxu0 %v406
    %802 = vmatprep.subr.mxu0 0.0
    %803 = vmatpush1.msra.mxu0 %v405
    %804 = vmatprep.subr.mxu0 0.0
    %805 = vmatpush1.msra.mxu0 %v404
    %806 = vmatprep.subr.mxu0 0.0
    %807 = vmatpush1.msra.mxu0 %v403
    %808 = vmatprep.subr.mxu0 0.0
    %809 = vmatpush1.msra.mxu0 %v402
    %810 = vmatprep.subr.mxu0 0.0
    %811 = vmatpush1.msra.mxu0 %v401
    %812 = vmatprep.subr.mxu0 0.0
    %813 = vmatpush1.msra.mxu0 %v400
    %814 = vmatprep.subr.mxu0 0.0
    %815 = vmatpush1.msra.mxu0 %v399
    %816 = vmatprep.subr.mxu0 0.0
    %817 = vmatpush1.msra.mxu0 %v398
    %818 = vmatprep.subr.mxu0 0.0
    %819 = vmatpush1.msra.mxu0 %v397
    %820 = vmatprep.subr.mxu0 0.0
    %821 = vmatpush1.msra.mxu0 %v396
    %822 = vmatprep.subr.mxu0 0.0
    %823 = vmatpush1.msra.mxu0 %v395
    %824 = vmatprep.subr.mxu0 0.0
    %825 = vmatpush2.msra.mxu0 %v426
    %826 = vmatprep.subr.mxu0 0.0
    %827 = vmatpush2.msra.mxu0 %v425
    %828 = vmatprep.subr.mxu0 0.0
    %829 = vmatpush2.msra.mxu0 %v424
    %830 = vmatprep.subr.mxu0 0.0
    %831 = vmatpush2.msra.mxu0 %v423
    %832 = vmatprep.subr.mxu0 0.0
    %833 = vmatpush2.msra.mxu0 %v422
    %834 = vmatprep.subr.mxu0 0.0
    %835 = vmatpush2.msra.mxu0 %v421
    %836 = vmatprep.subr.mxu0 0.0
    %837 = vmatpush2.msra.mxu0 %v420
    %838 = vmatprep.subr.mxu0 0.0
    %839 = vmatpush2.msra.mxu0 %v419
    %840 = vmatprep.subr.mxu0 0.0
    %841 = vmatpush2.msra.mxu0 %v418
    %842 = vmatprep.subr.mxu0 0.0
    %843 = vmatpush2.msra.mxu0 %v417
    %844 = vmatprep.subr.mxu0 0.0
    %845 = vmatpush2.msra.mxu0 %v416
    %846 = vmatprep.subr.mxu0 0.0
    %847 = vmatpush2.msra.mxu0 %v415
    %848 = vmatprep.subr.mxu0 0.0
    %849 = vmatpush2.msra.mxu0 %v414
    %850 = vmatprep.subr.mxu0 0.0
    %851 = vmatpush2.msra.mxu0 %v413
    %852 = vmatprep.subr.mxu0 0.0
    %853 = vmatpush2.msra.mxu0 %v412
    %854 = vmatprep.subr.mxu0 0.0
    %855 = vmatpush2.msra.mxu0 %v411
    %856 = vmatprep.mubr.f32.mxu0 %v625
    %857 = vmatmul.mubr.f32.gmra.mxu0 %v624
    %v858 = vpop.f32.mrf.mxu0
    %v859 = vadd.f32 %v789, %v858
    %v860 = vpop.f32.mrf.mxu0
    %861 = vdwg.mxu0
    %862 = vmatprep.subr.mxu0 0.0
    %863 = vmatpush1.msra.mxu0 %v442
    %864 = vmatprep.subr.mxu0 0.0
    %865 = vmatpush1.msra.mxu0 %v441
    %866 = vmatprep.subr.mxu0 0.0
    %867 = vmatpush1.msra.mxu0 %v440
    %868 = vmatprep.subr.mxu0 0.0
    %869 = vmatpush1.msra.mxu0 %v439
    %870 = vmatprep.subr.mxu0 0.0
    %871 = vmatpush1.msra.mxu0 %v438
    %872 = vmatprep.subr.mxu0 0.0
    %873 = vmatpush1.msra.mxu0 %v437
    %874 = vmatprep.subr.mxu0 0.0
    %875 = vmatpush1.msra.mxu0 %v436
    %876 = vmatprep.subr.mxu0 0.0
    %877 = vmatpush1.msra.mxu0 %v435
    %878 = vmatprep.subr.mxu0 0.0
    %879 = vmatpush1.msra.mxu0 %v434
    %880 = vmatprep.subr.mxu0 0.0
    %881 = vmatpush1.msra.mxu0 %v433
    %882 = vmatprep.subr.mxu0 0.0
    %883 = vmatpush1.msra.mxu0 %v432
    %884 = vmatprep.subr.mxu0 0.0
    %885 = vmatpush1.msra.mxu0 %v431
    %886 = vmatprep.subr.mxu0 0.0
    %887 = vmatpush1.msra.mxu0 %v430
    %888 = vmatprep.subr.mxu0 0.0
    %889 = vmatpush1.msra.mxu0 %v429
    %890 = vmatprep.subr.mxu0 0.0
    %891 = vmatpush1.msra.mxu0 %v428
    %892 = vmatprep.subr.mxu0 0.0
    %893 = vmatpush1.msra.mxu0 %v427
    %894 = vmatprep.subr.mxu0 0.0
    %895 = vmatpush2.msra.mxu0 %v458
    %896 = vmatprep.subr.mxu0 0.0
    %897 = vmatpush2.msra.mxu0 %v457
    %898 = vmatprep.subr.mxu0 0.0
    %899 = vmatpush2.msra.mxu0 %v456
    %900 = vmatprep.subr.mxu0 0.0
    %901 = vmatpush2.msra.mxu0 %v455
    %902 = vmatprep.subr.mxu0 0.0
    %903 = vmatpush2.msra.mxu0 %v454
    %904 = vmatprep.subr.mxu0 0.0
    %905 = vmatpush2.msra.mxu0 %v453
    %906 = vmatprep.subr.mxu0 0.0
    %907 = vmatpush2.msra.mxu0 %v452
    %908 = vmatprep.subr.mxu0 0.0
    %909 = vmatpush2.msra.mxu0 %v451
    %910 = vmatprep.subr.mxu0 0.0
    %911 = vmatpush2.msra.mxu0 %v450
    %912 = vmatprep.subr.mxu0 0.0
    %913 = vmatpush2.msra.mxu0 %v449
    %914 = vmatprep.subr.mxu0 0.0
    %915 = vmatpush2.msra.mxu0 %v448
    %916 = vmatprep.subr.mxu0 0.0
    %917 = vmatpush2.msra.mxu0 %v447
    %918 = vmatprep.subr.mxu0 0.0
    %919 = vmatpush2.msra.mxu0 %v446
    %920 = vmatprep.subr.mxu0 0.0
    %921 = vmatpush2.msra.mxu0 %v445
    %922 = vmatprep.subr.mxu0 0.0
    %923 = vmatpush2.msra.mxu0 %v444
    %924 = vmatprep.subr.mxu0 0.0
    %925 = vmatpush2.msra.mxu0 %v443
    %926 = vmatprep.mubr.f32.mxu0 %v627
    %927 = vmatmul.mubr.f32.gmra.mxu0 %v626
    %v928 = vpop.f32.mrf.mxu0
    %v929 = vadd.f32 %v859, %v928
    %v930 = vpop.f32.mrf.mxu0
    %931 = vdwg.mxu0
    %932 = vmatprep.subr.mxu0 0.0
    %933 = vmatpush1.msra.mxu0 %v474
    %934 = vmatprep.subr.mxu0 0.0
    %935 = vmatpush1.msra.mxu0 %v473
    %936 = vmatprep.subr.mxu0 0.0
    %937 = vmatpush1.msra.mxu0 %v472
    %938 = vmatprep.subr.mxu0 0.0
    %939 = vmatpush1.msra.mxu0 %v471
    %940 = vmatprep.subr.mxu0 0.0
    %941 = vmatpush1.msra.mxu0 %v470
    %942 = vmatprep.subr.mxu0 0.0
    %943 = vmatpush1.msra.mxu0 %v469
    %944 = vmatprep.subr.mxu0 0.0
    %945 = vmatpush1.msra.mxu0 %v468
    %946 = vmatprep.subr.mxu0 0.0
    %947 = vmatpush1.msra.mxu0 %v467
    %948 = vmatprep.subr.mxu0 0.0
    %949 = vmatpush1.msra.mxu0 %v466
    %950 = vmatprep.subr.mxu0 0.0
    %951 = vmatpush1.msra.mxu0 %v465
    %952 = vmatprep.subr.mxu0 0.0
    %953 = vmatpush1.msra.mxu0 %v464
    %954 = vmatprep.subr.mxu0 0.0
    %955 = vmatpush1.msra.mxu0 %v463
    %956 = vmatprep.subr.mxu0 0.0
    %957 = vmatpush1.msra.mxu0 %v462
    %958 = vmatprep.subr.mxu0 0.0
    %959 = vmatpush1.msra.mxu0 %v461
    %960 = vmatprep.subr.mxu0 0.0
    %961 = vmatpush1.msra.mxu0 %v460
    %962 = vmatprep.subr.mxu0 0.0
    %963 = vmatpush1.msra.mxu0 %v459
    %964 = vmatprep.subr.mxu0 0.0
    %965 = vmatpush2.msra.mxu0 %v490
    %966 = vmatprep.subr.mxu0 0.0
    %967 = vmatpush2.msra.mxu0 %v489
    %968 = vmatprep.subr.mxu0 0.0
    %969 = vmatpush2.msra.mxu0 %v488
    %970 = vmatprep.subr.mxu0 0.0
    %971 = vmatpush2.msra.mxu0 %v487
    %972 = vmatprep.subr.mxu0 0.0
    %973 = vmatpush2.msra.mxu0 %v486
    %974 = vmatprep.subr.mxu0 0.0
    %975 = vmatpush2.msra.mxu0 %v485
    %976 = vmatprep.subr.mxu0 0.0
    %977 = vmatpush2.msra.mxu0 %v484
    %978 = vmatprep.subr.mxu0 0.0
    %979 = vmatpush2.msra.mxu0 %v483
    %980 = vmatprep.subr.mxu0 0.0
    %981 = vmatpush2.msra.mxu0 %v482
    %982 = vmatprep.subr.mxu0 0.0
    %983 = vmatpush2.msra.mxu0 %v481
    %984 = vmatprep.subr.mxu0 0.0
    %985 = vmatpush2.msra.mxu0 %v480
    %986 = vmatprep.subr.mxu0 0.0
    %987 = vmatpush2.msra.mxu0 %v479
    %988 = vmatprep.subr.mxu0 0.0
    %989 = vmatpush2.msra.mxu0 %v478
    %990 = vmatprep.subr.mxu0 0.0
    %991 = vmatpush2.msra.mxu0 %v477
    %992 = vmatprep.subr.mxu0 0.0
    %993 = vmatpush2.msra.mxu0 %v476
    %994 = vmatprep.subr.mxu0 0.0
    %995 = vmatpush2.msra.mxu0 %v475
    %996 = vmatprep.mubr.f32.mxu0 %v629
    %997 = vmatmul.mubr.f32.gmra.mxu0 %v628
    %v998 = vpop.f32.mrf.mxu0
    %v999 = vadd.f32 %v929, %v998
    %v1000 = vpop.f32.mrf.mxu0
    %1001 = vdwg.mxu0
    %1002 = vmatprep.subr.mxu0 0.0
    %1003 = vmatpush1.msra.mxu0 %v506
    %1004 = vmatprep.subr.mxu0 0.0
    %1005 = vmatpush1.msra.mxu0 %v505
    %1006 = vmatprep.subr.mxu0 0.0
    %1007 = vmatpush1.msra.mxu0 %v504
    %1008 = vmatprep.subr.mxu0 0.0
    %1009 = vmatpush1.msra.mxu0 %v503
    %1010 = vmatprep.subr.mxu0 0.0
    %1011 = vmatpush1.msra.mxu0 %v502
    %1012 = vmatprep.subr.mxu0 0.0
    %1013 = vmatpush1.msra.mxu0 %v501
    %1014 = vmatprep.subr.mxu0 0.0
    %1015 = vmatpush1.msra.mxu0 %v500
    %1016 = vmatprep.subr.mxu0 0.0
    %1017 = vmatpush1.msra.mxu0 %v499
    %1018 = vmatprep.subr.mxu0 0.0
    %1019 = vmatpush1.msra.mxu0 %v498
    %1020 = vmatprep.subr.mxu0 0.0
    %1021 = vmatpush1.msra.mxu0 %v497
    %1022 = vmatprep.subr.mxu0 0.0
    %1023 = vmatpush1.msra.mxu0 %v496
    %1024 = vmatprep.subr.mxu0 0.0
    %1025 = vmatpush1.msra.mxu0 %v495
    %1026 = vmatprep.subr.mxu0 0.0
    %1027 = vmatpush1.msra.mxu0 %v494
    %1028 = vmatprep.subr.mxu0 0.0
    %1029 = vmatpush1.msra.mxu0 %v493
    %1030 = vmatprep.subr.mxu0 0.0
    %1031 = vmatpush1.msra.mxu0 %v492
    %1032 = vmatprep.subr.mxu0 0.0
    %1033 = vmatpush1.msra.mxu0 %v491
    %1034 = vmatprep.subr.mxu0 0.0
    %1035 = vmatpush2.msra.mxu0 %v522
    %1036 = vmatprep.subr.mxu0 0.0
    %1037 = vmatpush2.msra.mxu0 %v521
    %1038 = vmatprep.subr.mxu0 0.0
    %1039 = vmatpush2.msra.mxu0 %v520
    %1040 = vmatprep.subr.mxu0 0.0
    %1041 = vmatpush2.msra.mxu0 %v519
    %1042 = vmatprep.subr.mxu0 0.0
    %1043 = vmatpush2.msra.mxu0 %v518
    %1044 = vmatprep.subr.mxu0 0.0
    %1045 = vmatpush2.msra.mxu0 %v517
    %1046 = vmatprep.subr.mxu0 0.0
    %1047 = vmatpush2.msra.mxu0 %v516
    %1048 = vmatprep.subr.mxu0 0.0
    %1049 = vmatpush2.msra.mxu0 %v515
    %1050 = vmatprep.subr.mxu0 0.0
    %1051 = vmatpush2.msra.mxu0 %v514
    %1052 = vmatprep.subr.mxu0 0.0
    %1053 = vmatpush2.msra.mxu0 %v513
    %1054 = vmatprep.subr.mxu0 0.0
    %1055 = vmatpush2.msra.mxu0 %v512
    %1056 = vmatprep.subr.mxu0 0.0
    %1057 = vmatpush2.msra.mxu0 %v511
    %1058 = vmatprep.subr.mxu0 0.0
    %1059 = vmatpush2.msra.mxu0 %v510
    %1060 = vmatprep.subr.mxu0 0.0
    %1061 = vmatpush2.msra.mxu0 %v509
    %1062 = vmatprep.subr.mxu0 0.0
    %1063 = vmatpush2.msra.mxu0 %v508
    %1064 = vmatprep.subr.mxu0 0.0
    %1065 = vmatpush2.msra.mxu0 %v507
    %1066 = vmatprep.mubr.f32.mxu0 %v631
    %1067 = vmatmul.mubr.f32.gmra.mxu0 %v630
    %v1068 = vpop.f32.mrf.mxu0
    %v1069 = vadd.f32 %v999, %v1068
    %v1070 = vpop.f32.mrf.mxu0
    %1071 = vdwg.mxu0
    %1072 = vmatprep.subr.mxu0 0.0
    %1073 = vmatpush1.msra.mxu0 %v538
    %1074 = vmatprep.subr.mxu0 0.0
    %1075 = vmatpush1.msra.mxu0 %v537
    %1076 = vmatprep.subr.mxu0 0.0
    %1077 = vmatpush1.msra.mxu0 %v536
    %1078 = vmatprep.subr.mxu0 0.0
    %1079 = vmatpush1.msra.mxu0 %v535
    %1080 = vmatprep.subr.mxu0 0.0
    %1081 = vmatpush1.msra.mxu0 %v534
    %1082 = vmatprep.subr.mxu0 0.0
    %1083 = vmatpush1.msra.mxu0 %v533
    %1084 = vmatprep.subr.mxu0 0.0
    %1085 = vmatpush1.msra.mxu0 %v532
    %1086 = vmatprep.subr.mxu0 0.0
    %1087 = vmatpush1.msra.mxu0 %v531
    %1088 = vmatprep.subr.mxu0 0.0
    %1089 = vmatpush1.msra.mxu0 %v530
    %1090 = vmatprep.subr.mxu0 0.0
    %1091 = vmatpush1.msra.mxu0 %v529
    %1092 = vmatprep.subr.mxu0 0.0
    %1093 = vmatpush1.msra.mxu0 %v528
    %1094 = vmatprep.subr.mxu0 0.0
    %1095 = vmatpush1.msra.mxu0 %v527
    %1096 = vmatprep.subr.mxu0 0.0
    %1097 = vmatpush1.msra.mxu0 %v526
    %1098 = vmatprep.subr.mxu0 0.0
    %1099 = vmatpush1.msra.mxu0 %v525
    %1100 = vmatprep.subr.mxu0 0.0
    %1101 = vmatpush1.msra.mxu0 %v524
    %1102 = vmatprep.subr.mxu0 0.0
    %1103 = vmatpush1.msra.mxu0 %v523
    %1104 = vmatprep.subr.mxu0 0.0
    %1105 = vmatpush2.msra.mxu0 %v554
    %1106 = vmatprep.subr.mxu0 0.0
    %1107 = vmatpush2.msra.mxu0 %v553
    %1108 = vmatprep.subr.mxu0 0.0
    %1109 = vmatpush2.msra.mxu0 %v552
    %1110 = vmatprep.subr.mxu0 0.0
    %1111 = vmatpush2.msra.mxu0 %v551
    %1112 = vmatprep.subr.mxu0 0.0
    %1113 = vmatpush2.msra.mxu0 %v550
    %1114 = vmatprep.subr.mxu0 0.0
    %1115 = vmatpush2.msra.mxu0 %v549
    %1116 = vmatprep.subr.mxu0 0.0
    %1117 = vmatpush2.msra.mxu0 %v548
    %1118 = vmatprep.subr.mxu0 0.0
    %1119 = vmatpush2.msra.mxu0 %v547
    %1120 = vmatprep.subr.mxu0 0.0
    %1121 = vmatpush2.msra.mxu0 %v546
    %1122 = vmatprep.subr.mxu0 0.0
    %1123 = vmatpush2.msra.mxu0 %v545
    %1124 = vmatprep.subr.mxu0 0.0
    %1125 = vmatpush2.msra.mxu0 %v544
    %1126 = vmatprep.subr.mxu0 0.0
    %1127 = vmatpush2.msra.mxu0 %v543
    %1128 = vmatprep.subr.mxu0 0.0
    %1129 = vmatpush2.msra.mxu0 %v542
    %1130 = vmatprep.subr.mxu0 0.0
    %1131 = vmatpush2.msra.mxu0 %v541
    %1132 = vmatprep.subr.mxu0 0.0
    %1133 = vmatpush2.msra.mxu0 %v540
    %1134 = vmatprep.subr.mxu0 0.0
    %1135 = vmatpush2.msra.mxu0 %v539
    %1136 = vmatprep.mubr.f32.mxu0 %v633
    %1137 = vmatmul.mubr.f32.gmra.mxu0 %v632
    %v1138 = vpop.f32.mrf.mxu0
    %v1139 = vadd.f32 %v1069, %v1138
    %v1140 = vpop.f32.mrf.mxu0
    %1141 = vdwg.mxu0
    %1142 = vmatprep.subr.mxu0 0.0
    %1143 = vmatpush1.msra.mxu0 %v570
    %1144 = vmatprep.subr.mxu0 0.0
    %1145 = vmatpush1.msra.mxu0 %v569
    %1146 = vmatprep.subr.mxu0 0.0
    %1147 = vmatpush1.msra.mxu0 %v568
    %1148 = vmatprep.subr.mxu0 0.0
    %1149 = vmatpush1.msra.mxu0 %v567
    %1150 = vmatprep.subr.mxu0 0.0
    %1151 = vmatpush1.msra.mxu0 %v566
    %1152 = vmatprep.subr.mxu0 0.0
    %1153 = vmatpush1.msra.mxu0 %v565
    %1154 = vmatprep.subr.mxu0 0.0
    %1155 = vmatpush1.msra.mxu0 %v564
    %1156 = vmatprep.subr.mxu0 0.0
    %1157 = vmatpush1.msra.mxu0 %v563
    %1158 = vmatprep.subr.mxu0 0.0
    %1159 = vmatpush1.msra.mxu0 %v562
    %1160 = vmatprep.subr.mxu0 0.0
    %1161 = vmatpush1.msra.mxu0 %v561
    %1162 = vmatprep.subr.mxu0 0.0
    %1163 = vmatpush1.msra.mxu0 %v560
    %1164 = vmatprep.subr.mxu0 0.0
    %1165 = vmatpush1.msra.mxu0 %v559
    %1166 = vmatprep.subr.mxu0 0.0
    %1167 = vmatpush1.msra.mxu0 %v558
    %1168 = vmatprep.subr.mxu0 0.0
    %1169 = vmatpush1.msra.mxu0 %v557
    %1170 = vmatprep.subr.mxu0 0.0
    %1171 = vmatpush1.msra.mxu0 %v556
    %1172 = vmatprep.subr.mxu0 0.0
    %1173 = vmatpush1.msra.mxu0 %v555
    %1174 = vmatprep.subr.mxu0 0.0
    %1175 = vmatpush2.msra.mxu0 %v586
    %1176 = vmatprep.subr.mxu0 0.0
    %1177 = vmatpush2.msra.mxu0 %v585
    %1178 = vmatprep.subr.mxu0 0.0
    %1179 = vmatpush2.msra.mxu0 %v584
    %1180 = vmatprep.subr.mxu0 0.0
    %1181 = vmatpush2.msra.mxu0 %v583
    %1182 = vmatprep.subr.mxu0 0.0
    %1183 = vmatpush2.msra.mxu0 %v582
    %1184 = vmatprep.subr.mxu0 0.0
    %1185 = vmatpush2.msra.mxu0 %v581
    %1186 = vmatprep.subr.mxu0 0.0
    %1187 = vmatpush2.msra.mxu0 %v580
    %1188 = vmatprep.subr.mxu0 0.0
    %1189 = vmatpush2.msra.mxu0 %v579
    %1190 = vmatprep.subr.mxu0 0.0
    %1191 = vmatpush2.msra.mxu0 %v578
    %1192 = vmatprep.subr.mxu0 0.0
    %1193 = vmatpush2.msra.mxu0 %v577
    %1194 = vmatprep.subr.mxu0 0.0
    %1195 = vmatpush2.msra.mxu0 %v576
    %1196 = vmatprep.subr.mxu0 0.0
    %1197 = vmatpush2.msra.mxu0 %v575
    %1198 = vmatprep.subr.mxu0 0.0
    %1199 = vmatpush2.msra.mxu0 %v574
    %1200 = vmatprep.subr.mxu0 0.0
    %1201 = vmatpush2.msra.mxu0 %v573
    %1202 = vmatprep.subr.mxu0 0.0
    %1203 = vmatpush2.msra.mxu0 %v572
    %1204 = vmatprep.subr.mxu0 0.0
    %1205 = vmatpush2.msra.mxu0 %v571
    %1206 = vmatprep.mubr.f32.mxu0 %v635
    %1207 = vmatmul.mubr.f32.gmra.mxu0 %v634
    %v1208 = vpop.f32.mrf.mxu0
    %v1209 = vadd.f32 %v1139, %v1208
    %v1210 = vpop.f32.mrf.mxu0
    %1211 = vdwg.mxu0
    %v1212 = vmul.f32 %v1209, 0.0625
    %v1213 = vld [vmem:[%s2] sm:$0x1]
    %v1215 = vlaneseq
    %v1216 = vshrl.u32 %v1215, 7
    %v1217 = vsub.s32 0, %v1216
    %v1218 = vrot.slane %v1213, %v1217
    %v1220 = vadd.f32 %v1212, %v1218
    %1221 = vst [vmem:[#allocation7] sm:$0x3] %v1220
    // Predicated region
    $region22: #{tpu_custom_call.1} parent=1 // pred_check
      _
    $region23: #{tpu_custom_call.1} parent=1 // pred_check_branch
      %1223 = sbr.rel (0) target = $region25
    $region24: #{tpu_custom_call.1} parent=1 // pred_region
      %s1225 = ssub.s32 32, 32
      %1226 = vsyncadd [#allocation4], %s1225
      %s1228 = sshll.u32 [#allocation7], 4
      %s1229 = int_to_ptr.vmem [resolvable:$true] %s1228
      %1231 = dma.vmem_to_hbm [thread:$0]  %s1229, 32, %s3, [#allocation4]
    $region25: #{tpu_custom_call.1} parent=1 // pred_fallthru
      _
    // Predicated region
    $region26: #{tpu_custom_call.1} parent=1 // pred_check
      _
    $region27: #{tpu_custom_call.1} parent=1 // pred_check_branch
      %1233 = sbr.rel (0) target = $region29
    $region28: #{tpu_custom_call.1} parent=1 // pred_region
      %1234 = dma.done [#allocation4], 32
    $region29: #{tpu_custom_call.1} parent=1 // pred_fallthru
      _
    %1235 = vsyncpa [#allocation3], 1
    %1236 = vsyncpa [#allocation6], 1
    %1237 = vsyncpa [#allocation4], 1

</llo_original>
